<compile_context>
chip_gen: v5e
topology: v5e:2x2
jax: 0.10.0
libtpu: 0.0.40
codegen_flags: <defaults>
</compile_context>

<pallas_src>
import functools
import math

import jax
import jax.numpy as jnp
from jax.experimental import pallas as pl
from jax.experimental.pallas import tpu as pltpu


def _round_up(x, m):
    return (x + m - 1) // m * m


def _patch_embed_kernel(x_ref, w_ref, b_ref, o_ref):
    # x_ref: (TM, Kp)  flattened-patch tile
    # w_ref: (Kp, TN)  projection weight tile (conv weight flattened & transposed)
    # b_ref: (1,  TN)  bias tile
    # o_ref: (TM, TN)
    acc = jnp.dot(x_ref[...], w_ref[...], preferred_element_type=jnp.float32)
    o_ref[...] = (acc + b_ref[...].astype(jnp.float32)).astype(o_ref.dtype)


def _choose_tiles(M, k_pad, n_pad, elt_bytes):
    """Pick (tm, tn) maximizing tile size under a double-buffered VMEM budget."""
    # Whole-N tile keeps weight/bias resident across the M sweep when feasible.
    tn = n_pad if n_pad <= 1024 else 512

    if M >= 512:
        tm_candidates = (512, 256, 128)
    elif M >= 256:
        tm_candidates = (256, 128)
    elif M >= 128:
        tm_candidates = (128,)
    else:
        tm_candidates = (_round_up(M, 8),)

    budget = 40 << 20  # double-buffered working set budget (v7x-safe)
    tm = tm_candidates[-1]
    for cand in tm_candidates:
        need = 2 * (cand * k_pad + k_pad * tn + tn + cand * tn) * elt_bytes
        if need <= budget:
            tm = cand
            break
    return tm, tn


@functools.partial(jax.jit, static_argnums=(3,))
def patch_embedding(x, weight, bias, patch_size):
    """x: (b, c, h, w) NCHW; weight: (hidden, c, p, p) OIHW; bias: (hidden,).

    Returns (b, num_patches, hidden), matching
    PatchEmbedding.forward = Conv2d(stride=p) -> view -> permute.
    """
    b, c, h, w = x.shape
    hidden = weight.shape[0]
    p = patch_size
    nh, nw = h // p, w // p
    num_patches = nh * nw
    patch_dim = c * p * p

    M = b * num_patches
    # Lane-dense K and N (multiples of 128).
    k_pad = _round_up(patch_dim, 128)
    n_pad = _round_up(hidden, 128)

    elt_bytes = max(x.dtype.itemsize, 4)  # f32 accumulation working set
    tm, tn = _choose_tiles(M, k_pad, n_pad, elt_bytes)
    m_pad = _round_up(M, tm)

    # --- glue (single fused XLA op): extract non-overlapping patches in
    # nn.Conv2d's (c, kh, kw) flatten order, flatten batch+patch into M,
    # and zero-pad to (m_pad, k_pad).
    # (b, c, h, w) -> (b, c, nh, p, nw, p) -> (b, nh, nw, c, p, p) -> (M, K)
    patches = x.reshape(b, c, nh, p, nw, p)
    patches = patches.transpose(0, 2, 4, 1, 3, 5).reshape(M, patch_dim)
    patches = jnp.pad(patches, ((0, m_pad - M), (0, k_pad - patch_dim)))

    # conv weight (hidden, c, p, p) -> (patch_dim, hidden), zero-pad K/N.
    w_mat = weight.reshape(hidden, patch_dim).T
    w_mat = jnp.pad(w_mat, ((0, k_pad - patch_dim), (0, n_pad - hidden)))
    b_mat = jnp.pad(bias, (0, n_pad - hidden)).reshape(1, n_pad)

    grid = (m_pad // tm, n_pad // tn)

    # Double-buffered working set + headroom; never below the 32 MiB scoped
    # default, raised only if the tiles genuinely need more.
    vmem_need = 2 * (tm * k_pad + k_pad * tn + tn + tm * tn) * elt_bytes + (4 << 20)
    vmem_limit = int(max(vmem_need, 32 << 20))

    bytes_elt = x.dtype.itemsize
    cost = pl.CostEstimate(
        flops=2 * M * patch_dim * hidden,
        transcendentals=0,
        bytes_accessed=bytes_elt * (M * patch_dim + patch_dim * hidden
                                    + hidden + M * hidden),
    )

    out = pl.pallas_call(
        _patch_embed_kernel,
        out_shape=jax.ShapeDtypeStruct((m_pad, n_pad), x.dtype),
        grid_spec=pltpu.PrefetchScalarGridSpec(
            num_scalar_prefetch=0,
            grid=grid,
            in_specs=[
                pl.BlockSpec((tm, k_pad), lambda i, j: (i, 0)),
                pl.BlockSpec((k_pad, tn), lambda i, j: (0, j)),
                pl.BlockSpec((1, tn), lambda i, j: (0, j)),
            ],
            out_specs=pl.BlockSpec((tm, tn), lambda i, j: (i, j)),
        ),
        compiler_params=pltpu.CompilerParams(
            dimension_semantics=("parallel", "parallel"),
            vmem_limit_bytes=vmem_limit,
        ),
        cost_estimate=cost,
    )(patches, w_mat, b_mat)

    # Drop padding, restore (b, num_patches, hidden).
    return out[:M, :hidden].reshape(b, num_patches, hidden)


def _reference(x, weight, bias, patch_size):
    # pure-JAX reference using a real convolution (NCHW, OIHW)
    y = jax.lax.conv_general_dilated(
        x, weight,
        window_strides=(patch_size, patch_size),
        padding="VALID",
        dimension_numbers=("NCHW", "OIHW", "NCHW"),
    ) + bias.reshape(1, -1, 1, 1)
    b, hdim = y.shape[0], y.shape[1]
    return y.reshape(b, hdim, -1).transpose(0, 2, 1)


if __name__ == "__main__":
    hidden_dim = 32
    patch_size = 4
    b, c, h, w = 2, 3, 16, 16  # Conv2d in_channels=3 per the module

    key = jax.random.PRNGKey(0)
    kx, kw, kb = jax.random.split(key, 3)

    x = jax.random.normal(kx, (b, c, h, w), dtype=jnp.float32)

    # Deterministic Conv2d-style init (uniform +/- 1/sqrt(fan_in))
    fan_in = c * patch_size * patch_size
    bound = 1.0 / math.sqrt(fan_in)
    weight = jax.random.uniform(
        kw, (hidden_dim, c, patch_size, patch_size),
        minval=-bound, maxval=bound, dtype=jnp.float32)
    bias = jax.random.uniform(
        kb, (hidden_dim,), minval=-bound, maxval=bound, dtype=jnp.float32)

    out = patch_embedding(x, weight, bias, patch_size)
    out = jax.block_until_ready(out)

    ref = _reference(x, weight, bias, patch_size)
    assert out.shape == (b, (h // patch_size) * (w // patch_size), hidden_dim)
    assert jnp.allclose(out, ref, atol=1e-5, rtol=1e-5)

    print("KERNEL_OK")
</pallas_src>

<mosaic_0001>
module attributes {stable_mosaic.version = 11 : i64} {
  func.func @_patch_embed_kernel(%arg0: i32, %arg1: i32, %arg2: memref<32x128xf32, #tpu.memory_space<vmem>>, %arg3: memref<128x128xf32, #tpu.memory_space<vmem>>, %arg4: memref<1x128xf32, #tpu.memory_space<vmem>>, %arg5: memref<32x128xf32, #tpu.memory_space<vmem>>) attributes {dimension_semantics = [#tpu.dimension_semantics<parallel>, #tpu.dimension_semantics<parallel>], iteration_bounds = array<i64: 1, 1>, scalar_prefetch = 0 : i64, scratch_operands = 0 : i64, tpu.core_type = #tpu.core_type<tc>, window_params = [{transform_indices = @transform_0, window_bounds = array<i64: 32, 128>}, {transform_indices = @transform_1, window_bounds = array<i64: 128, 128>}, {transform_indices = @transform_2, window_bounds = array<i64: 1, 128>}, {transform_indices = @transform_3, window_bounds = array<i64: 32, 128>}]} {
    %c0 = arith.constant 0 : index
    %c0_0 = arith.constant 0 : index
    %0 = vector.load %arg2[%c0, %c0_0] : memref<32x128xf32, #tpu.memory_space<vmem>>, vector<32x128xf32>
    %c0_1 = arith.constant 0 : index
    %c0_2 = arith.constant 0 : index
    %1 = vector.load %arg3[%c0_1, %c0_2] : memref<128x128xf32, #tpu.memory_space<vmem>>, vector<128x128xf32>
    %cst = arith.constant dense<0.000000e+00> : vector<32x128xf32>
    %2 = tpu.matmul %0, %1, %cst {dimension_numbers = #tpu.dot_dimension_numbers<[1], [0], [0], [1], [0, 0, 1, 1], [], []>} : vector<32x128xf32>, vector<128x128xf32>, vector<32x128xf32> -> vector<32x128xf32>
    %c0_3 = arith.constant 0 : index
    %c0_4 = arith.constant 0 : index
    %3 = vector.load %arg4[%c0_3, %c0_4] : memref<1x128xf32, #tpu.memory_space<vmem>>, vector<1x128xf32>
    %4 = vector.broadcast %3 : vector<1x128xf32> to vector<32x128xf32>
    %5 = arith.addf %2, %4 : vector<32x128xf32>
    %c0_5 = arith.constant 0 : index
    %c0_6 = arith.constant 0 : index
    %6 = vector.load %arg5[%c0_5, %c0_6] : memref<32x128xf32, #tpu.memory_space<vmem>>, vector<32x128xf32>
    tpu.vector_store %arg5[%c0_5, %c0_6], %5 {strides = array<i32>} : memref<32x128xf32, #tpu.memory_space<vmem>>, vector<32x128xf32>,
    return
  }
  func.func @transform_0(%arg0: i32, %arg1: i32) -> (i32, i32) {
    %c0_i32 = arith.constant 0 : i32
    %c0_i32_0 = arith.constant 0 : i32
    return %arg0, %c0_i32 : i32, i32
  }
  func.func @transform_1(%arg0: i32, %arg1: i32) -> (i32, i32) {
    %c0_i32 = arith.constant 0 : i32
    %c0_i32_0 = arith.constant 0 : i32
    return %c0_i32, %arg1 : i32, i32
  }
  func.func @transform_2(%arg0: i32, %arg1: i32) -> (i32, i32) {
    %c0_i32 = arith.constant 0 : i32
    %c0_i32_0 = arith.constant 0 : i32
    return %c0_i32, %arg1 : i32, i32
  }
  func.func @transform_3(%arg0: i32, %arg1: i32) -> (i32, i32) {
    %c0_i32 = arith.constant 0 : i32
    return %arg0, %arg1 : i32, i32
  }
}

</mosaic_0001>

<llo_original>
// kernel: patch_embedding.1
$region0: #{patch_embedding.1}
  #allocation0 [shape = 'u32[]', space=smem, size = 0x4, offset = 0x4, fixed_abs, tag = 'smem constant byte address 0x4 - core index']
  #allocation1 [shape = 'u32[72,128]{1,0:T(1,128)}', space=vmem, size = 0x9000, scoped, tag = 'internal scratch']
  %s0 = inlined_call_operand.vmem [shape: f32[32,128], index: 0, kind: input, shape index: {}]
  %s1 = inlined_call_operand.vmem [shape: f32[128,128], index: 1, kind: input, shape index: {}]
  %s2 = inlined_call_operand.vmem [shape: f32[1,128], index: 2, kind: input, shape index: {}]
  %s3 = inlined_call_operand.hbm [shape: f32[32,128], index: 3, kind: output, shape index: {}]
  %s4 = sld [smem:[#allocation0]]
  $region22: #{patch_embedding.1} parent=0
    _
  %s6 = ssub.s32 1, %s4
  %s7 = scalar_select 0, %s6, %s4
  $region1: #{patch_embedding.1} parent=0
    #allocation2 [shape = 'u8[16384]{0}', space=vmem, size = 0x4000, scoped, tag = 'output window, operand 0, single buffered']
    #allocation3 [shape = 's32[1]{0}', space=sflag, size = 0x4, scoped, tag = 'scoped memory for patch_embedding.1']
    %8 = vsyncpa [#allocation3], 0
    // Predicated region
    $region2: #{patch_embedding.1} parent=1 // pred_check
      _
    $region3: #{patch_embedding.1} parent=1 // pred_check_branch
      %10 = sbr.rel (0) target = $region5
    $region4: #{patch_embedding.1} parent=1 // pred_region
      _
    $region5: #{patch_embedding.1} parent=1 // pred_fallthru
      _
    // Predicated region
    $region6: #{patch_embedding.1} parent=1 // pred_check
      _
    $region7: #{patch_embedding.1} parent=1 // pred_check_branch
      %12 = sbr.rel (0) target = $region9
    $region8: #{patch_embedding.1} parent=1 // pred_region
      _
    $region9: #{patch_embedding.1} parent=1 // pred_fallthru
      _
    // Predicated region
    $region10: #{patch_embedding.1} parent=1 // pred_check
      _
    $region11: #{patch_embedding.1} parent=1 // pred_check_branch
      %14 = sbr.rel (0) target = $region13
    $region12: #{patch_embedding.1} parent=1 // pred_region
      _
    $region13: #{patch_embedding.1} parent=1 // pred_fallthru
      _
    %v15 = vld [vmem:[%s0] sm:$0xff]
    %v16 = vld [vmem:[%s0 + $0x8] sm:$0xff]
    %v17 = vld [vmem:[%s0 + $0x10] sm:$0xff]
    %v18 = vld [vmem:[%s0 + $0x18] sm:$0xff]
    %v19 = vld [vmem:[%s1] sm:$0xff]
    %v20 = vld [vmem:[%s1 + $0x8] sm:$0xff]
    %v21 = vld [vmem:[%s1 + $0x10] sm:$0xff]
    %v22 = vld [vmem:[%s1 + $0x18] sm:$0xff]
    %v23 = vld [vmem:[%s1 + $0x20] sm:$0xff]
    %v24 = vld [vmem:[%s1 + $0x28] sm:$0xff]
    %v25 = vld [vmem:[%s1 + $0x30] sm:$0xff]
    %v26 = vld [vmem:[%s1 + $0x38] sm:$0xff]
    %v27 = vld [vmem:[%s1 + $0x40] sm:$0xff]
    %v28 = vld [vmem:[%s1 + $0x48] sm:$0xff]
    %v29 = vld [vmem:[%s1 + $0x50] sm:$0xff]
    %v30 = vld [vmem:[%s1 + $0x58] sm:$0xff]
    %v31 = vld [vmem:[%s1 + $0x60] sm:$0xff]
    %v32 = vld [vmem:[%s1 + $0x68] sm:$0xff]
    %v33 = vld [vmem:[%s1 + $0x70] sm:$0xff]
    %v34 = vld [vmem:[%s1 + $0x78] sm:$0xff]
    %v35 = vld [vmem:[%s2] sm:$0x1]
    %v37 = vperm.slane %v35, 0
    %39 = vmatpush.msra.mxu0 %v34
    %40 = vmatpush.msra.mxu0 %v33
    %41 = vmatpush.msra.mxu0 %v32
    %42 = vmatpush.msra.mxu0 %v31
    %43 = vmatpush.msra.mxu0 %v30
    %44 = vmatpush.msra.mxu0 %v29
    %45 = vmatpush.msra.mxu0 %v28
    %46 = vmatpush.msra.mxu0 %v27
    %47 = vmatpush.msra.mxu0 %v26
    %48 = vmatpush.msra.mxu0 %v25
    %49 = vmatpush.msra.mxu0 %v24
    %50 = vmatpush.msra.mxu0 %v23
    %51 = vmatpush.msra.mxu0 %v22
    %52 = vmatpush.msra.mxu0 %v21
    %53 = vmatpush.msra.mxu0 %v20
    %54 = vmatpush.msra.mxu0 %v19
    %55 = vmatmul.f32.gmra.mxu0 %v15
    %v56 = vpop.f32.mrf.mxu0
    %v57 = vadd.f32 %v37, %v56
    %58 = vmatmul.f32.gmra.mxu0 %v16
    %v59 = vpop.f32.mrf.mxu0
    %v60 = vadd.f32 %v37, %v59
    %61 = vmatmul.f32.gmra.mxu0 %v17
    %v62 = vpop.f32.mrf.mxu0
    %v63 = vadd.f32 %v37, %v62
    %64 = vmatmul.f32.gmra.mxu0 %v18
    %v65 = vpop.f32.mrf.mxu0
    %v66 = vadd.f32 %v37, %v65
    %67 = vdwg.mxu0
    %68 = vst [vmem:[#allocation2] sm:$0xff] %v57
    %69 = vst [vmem:[#allocation2 + $0x8] sm:$0xff] %v60
    %70 = vst [vmem:[#allocation2 + $0x10] sm:$0xff] %v63
    %71 = vst [vmem:[#allocation2 + $0x18] sm:$0xff] %v66
    // Predicated region
    $region14: #{patch_embedding.1} parent=1 // pred_check
      _
    $region15: #{patch_embedding.1} parent=1 // pred_check_branch
      %73 = sbr.rel (0) target = $region17
    $region16: #{patch_embedding.1} parent=1 // pred_region
      %75 = vsyncadd [#allocation3], 0
      %s76 = sshll.u32 [#allocation2], 4
      %s77 = int_to_ptr.vmem [resolvable:$true] %s76
      %s78 = sshll.u32 %s3, 4
      %s79 = int_to_ptr.hbm [resolvable:$true] %s78
      %84 = dma.vmem_to_hbm [thread:$0]  %s77, 512, %s79, [#allocation3], 128, 128, 8
    $region17: #{patch_embedding.1} parent=1 // pred_fallthru
      _
    // Predicated region
    $region18: #{patch_embedding.1} parent=1 // pred_check
      _
    $region19: #{patch_embedding.1} parent=1 // pred_check_branch
      %86 = sbr.rel (0) target = $region21
    $region20: #{patch_embedding.1} parent=1 // pred_region
      %88 = dma.done [#allocation3], 512
    $region21: #{patch_embedding.1} parent=1 // pred_fallthru
      _
    %89 = vsyncpa [#allocation3], 1

</llo_original>
